<compile_context>
chip_gen: v5e
topology: v5e:2x2
jax: 0.10.0
libtpu: 0.0.40
codegen_flags: <defaults>
</compile_context>

<pallas_src>
import jax
import jax.numpy as jnp
from jax.experimental import pallas as pl
from jax.experimental.pallas import tpu as pltpu


def value_net_kernel(x_ref, w1t_ref, b1_ref, w2_ref, b2_ref, out_ref):
    # x:    [bt, D]
    # w1t:  [D, H1]   (pre-transposed fc1 weight)
    # b1:   [1, H1]
    # w2:   [1, H1]   (fc2 weight as a row)
    # b2:   [1, 1]
    x = x_ref[...]

    # fc1: x @ W1^T  ==  x @ w1t   (MXU matmul, f32 accumulate, no in-kernel .T)
    h = jnp.dot(x, w1t_ref[...], preferred_element_type=jnp.float32)   # [bt, H1]
    h = jnp.maximum(h + b1_ref[...], 0.0)                              # bias + ReLU (VPU)

    # fc2 (output width 1): VPU multiply + 16-wide lane reduce instead of a
    # <1%-utilized MXU matmul; keeps the MXU free and avoids the result-FIFO pop.
    y = jnp.sum(h * w2_ref[...], axis=-1, keepdims=True) + b2_ref[...]  # [bt, 1]

    out_ref[...] = y.astype(out_ref.dtype)


def value_network_forward(x, w1, b1, w2, b2, *, block_b=1024):
    """Pallas forward pass of ValueNetwork. x: [B, D] float32 -> [B, 1]."""
    B, D = x.shape
    H1 = w1.shape[0]   # 16
    H2 = w2.shape[0]   # 1

    # One-time weight reshapes outside the kernel (paid once, not per call step).
    w1t = w1.T.astype(jnp.float32)          # [D, H1]
    b1_2d = b1.reshape(1, H1)               # [1, H1]
    w2_row = w2.reshape(1, H1)              # [1, H1]
    b2_2d = b2.reshape(1, H2)               # [1, 1]

    # Batch tiling: full-array block for small B, otherwise 8-aligned tiles of
    # size block_b (double-buffered x tile at D=32 f32 stays far below the
    # v7x 64 MiB VMEM budget). Pad B so it divides evenly into tiles.
    if B <= block_b:
        bt = B
        b_pad = B
    else:
        bt = (block_b // 8) * 8
        b_pad = pl.cdiv(B, bt) * bt

    x_in = x if b_pad == B else jnp.pad(x, ((0, b_pad - B), (0, 0)))
    grid = (b_pad // bt,)

    # TODO(synk): for very large B, a lane-dense [1, bt] output (batch on the
    # lane axis) would avoid masked vst.msk column stores; kept [bt, 1] here
    # to avoid an in-kernel transpose at these shapes.
    out = pl.pallas_call(
        value_net_kernel,
        out_shape=jax.ShapeDtypeStruct((b_pad, H2), jnp.float32),
        grid=grid,
        in_specs=[
            pl.BlockSpec((bt, D), lambda i: (i, 0)),    # streamed batch tile
            pl.BlockSpec((D, H1), lambda i: (0, 0)),    # weights: constant index_map,
            pl.BlockSpec((1, H1), lambda i: (0, 0)),    # stay VMEM-resident across steps
            pl.BlockSpec((1, H1), lambda i: (0, 0)),
            pl.BlockSpec((1, H2), lambda i: (0, 0)),
        ],
        out_specs=pl.BlockSpec((bt, H2), lambda i: (i, 0)),
        compiler_params=pltpu.CompilerParams(
            dimension_semantics=("parallel",),          # shard batch across TCs (v7x)
        ),
    )(x_in, w1t, b1_2d, w2_row, b2_2d)

    return out[:B] if b_pad != B else out


def init_params(key, input_size):
    """Deterministic parameter init matching nn.Linear shapes (uniform fan-in)."""
    k1, k2, k3, k4 = jax.random.split(key, 4)
    h1, h2 = 16, 1
    bound1 = 1.0 / jnp.sqrt(input_size)
    bound2 = 1.0 / jnp.sqrt(h1)
    w1 = jax.random.uniform(k1, (h1, input_size), jnp.float32, -bound1, bound1)
    b1 = jax.random.uniform(k2, (h1,), jnp.float32, -bound1, bound1)
    w2 = jax.random.uniform(k3, (h2, h1), jnp.float32, -bound2, bound2)
    b2 = jax.random.uniform(k4, (h2,), jnp.float32, -bound2, bound2)
    return w1, b1, w2, b2


def _reference(x, w1, b1, w2, b2):
    return jnp.maximum(x @ w1.T + b1, 0.0) @ w2.T + b2


if __name__ == "__main__":
    key = jax.random.PRNGKey(0)
    k_x, k_x2, k_p = jax.random.split(key, 3)

    input_size = 32
    w1, b1, w2, b2 = init_params(k_p, input_size)

    # Small single-block case (grid=(1,), full-array block).
    batch = 8
    x = jax.random.normal(k_x, (batch, input_size), jnp.float32)
    out = value_network_forward(x, w1, b1, w2, b2)
    jax.block_until_ready(out)
    ref = _reference(x, w1, b1, w2, b2)
    assert out.shape == (batch, 1)
    assert jnp.allclose(out, ref, atol=1e-5, rtol=1e-5)

    # Tiled + padded case (exercises the batch grid and the pad/slice path).
    batch2 = 1050
    x2 = jax.random.normal(k_x2, (batch2, input_size), jnp.float32)
    out2 = value_network_forward(x2, w1, b1, w2, b2, block_b=512)
    jax.block_until_ready(out2)
    ref2 = _reference(x2, w1, b1, w2, b2)
    assert out2.shape == (batch2, 1)
    assert jnp.allclose(out2, ref2, atol=1e-5, rtol=1e-5)

    print("KERNEL_OK")
</pallas_src>

<mosaic_0001>
module attributes {stable_mosaic.version = 11 : i64} {
  func.func @value_net_kernel(%arg0: i32, %arg1: memref<8x32xf32, #tpu.memory_space<vmem>>, %arg2: memref<32x16xf32, #tpu.memory_space<vmem>>, %arg3: memref<1x16xf32, #tpu.memory_space<vmem>>, %arg4: memref<1x16xf32, #tpu.memory_space<vmem>>, %arg5: memref<1x1xf32, #tpu.memory_space<vmem>>, %arg6: memref<8x1xf32, #tpu.memory_space<vmem>>) attributes {dimension_semantics = [#tpu.dimension_semantics<parallel>], iteration_bounds = array<i64: 1>, scalar_prefetch = 0 : i64, scratch_operands = 0 : i64, tpu.core_type = #tpu.core_type<tc>, window_params = [{transform_indices = @transform_0, window_bounds = array<i64: 8, 32>}, {pipeline_mode = #tpu.pipeline_mode<synchronous>, transform_indices = @transform_1, window_bounds = array<i64: 32, 16>}, {pipeline_mode = #tpu.pipeline_mode<synchronous>, transform_indices = @transform_2, window_bounds = array<i64: 1, 16>}, {pipeline_mode = #tpu.pipeline_mode<synchronous>, transform_indices = @transform_3, window_bounds = array<i64: 1, 16>}, {pipeline_mode = #tpu.pipeline_mode<synchronous>, transform_indices = @transform_4, window_bounds = array<i64: 1, 1>}, {transform_indices = @transform_5, window_bounds = array<i64: 8, 1>}]} {
    %c0 = arith.constant 0 : index
    %c0_0 = arith.constant 0 : index
    %0 = vector.load %arg1[%c0, %c0_0] : memref<8x32xf32, #tpu.memory_space<vmem>>, vector<8x32xf32>
    %c0_1 = arith.constant 0 : index
    %c0_2 = arith.constant 0 : index
    %1 = vector.load %arg2[%c0_1, %c0_2] : memref<32x16xf32, #tpu.memory_space<vmem>>, vector<32x16xf32>
    %cst = arith.constant dense<0.000000e+00> : vector<8x16xf32>
    %2 = tpu.matmul %0, %1, %cst {dimension_numbers = #tpu.dot_dimension_numbers<[1], [0], [0], [1], [0, 0, 1, 1], [], []>} : vector<8x32xf32>, vector<32x16xf32>, vector<8x16xf32> -> vector<8x16xf32>
    %c0_3 = arith.constant 0 : index
    %c0_4 = arith.constant 0 : index
    %3 = vector.load %arg3[%c0_3, %c0_4] : memref<1x16xf32, #tpu.memory_space<vmem>>, vector<1x16xf32>
    %4 = vector.broadcast %3 : vector<1x16xf32> to vector<8x16xf32>
    %5 = arith.addf %2, %4 : vector<8x16xf32>
    %cst_5 = arith.constant 0.000000e+00 : f32
    %6 = vector.broadcast %cst_5 : f32 to vector<8x16xf32>
    %7 = arith.maximumf %5, %6 : vector<8x16xf32>
    %c0_6 = arith.constant 0 : index
    %c0_7 = arith.constant 0 : index
    %8 = vector.load %arg4[%c0_6, %c0_7] : memref<1x16xf32, #tpu.memory_space<vmem>>, vector<1x16xf32>
    %9 = vector.broadcast %8 : vector<1x16xf32> to vector<8x16xf32>
    %10 = arith.mulf %7, %9 : vector<8x16xf32>
    %cst_8 = arith.constant dense<0.000000e+00> : vector<8xf32>
    %11 = vector.multi_reduction <add>, %10, %cst_8 [1] : vector<8x16xf32> to vector<8xf32>
    %12 = vector.shape_cast %11 : vector<8xf32> to vector<8x1xf32>
    %c0_9 = arith.constant 0 : index
    %c0_10 = arith.constant 0 : index
    %13 = vector.load %arg5[%c0_9, %c0_10] : memref<1x1xf32, #tpu.memory_space<vmem>>, vector<1x1xf32>
    %14 = vector.broadcast %13 : vector<1x1xf32> to vector<8x1xf32>
    %15 = arith.addf %12, %14 : vector<8x1xf32>
    %c0_11 = arith.constant 0 : index
    %c0_12 = arith.constant 0 : index
    %16 = vector.load %arg6[%c0_11, %c0_12] : memref<8x1xf32, #tpu.memory_space<vmem>>, vector<8x1xf32>
    tpu.vector_store %arg6[%c0_11, %c0_12], %15 {strides = array<i32>} : memref<8x1xf32, #tpu.memory_space<vmem>>, vector<8x1xf32>,
    return
  }
  func.func @transform_0(%arg0: i32) -> (i32, i32) {
    %c0_i32 = arith.constant 0 : i32
    %c0_i32_0 = arith.constant 0 : i32
    return %arg0, %c0_i32 : i32, i32
  }
  func.func @transform_1(%arg0: i32) -> (i32, i32) {
    %c0_i32 = arith.constant 0 : i32
    %c0_i32_0 = arith.constant 0 : i32
    %c0_i32_1 = arith.constant 0 : i32
    return %c0_i32, %c0_i32_0 : i32, i32
  }
  func.func @transform_2(%arg0: i32) -> (i32, i32) {
    %c0_i32 = arith.constant 0 : i32
    %c0_i32_0 = arith.constant 0 : i32
    %c0_i32_1 = arith.constant 0 : i32
    return %c0_i32, %c0_i32_0 : i32, i32
  }
  func.func @transform_3(%arg0: i32) -> (i32, i32) {
    %c0_i32 = arith.constant 0 : i32
    %c0_i32_0 = arith.constant 0 : i32
    %c0_i32_1 = arith.constant 0 : i32
    return %c0_i32, %c0_i32_0 : i32, i32
  }
  func.func @transform_4(%arg0: i32) -> (i32, i32) {
    %c0_i32 = arith.constant 0 : i32
    %c0_i32_0 = arith.constant 0 : i32
    %c0_i32_1 = arith.constant 0 : i32
    return %c0_i32, %c0_i32_0 : i32, i32
  }
  func.func @transform_5(%arg0: i32) -> (i32, i32) {
    %c0_i32 = arith.constant 0 : i32
    %c0_i32_0 = arith.constant 0 : i32
    return %arg0, %c0_i32 : i32, i32
  }
}

</mosaic_0001>

<llo_original>
// kernel: tpu_custom_call.1
$region0: #{tpu_custom_call.1}
  #allocation0 [shape = 'u32[]', space=smem, size = 0x4, offset = 0x4, fixed_abs, tag = 'smem constant byte address 0x4 - core index']
  #allocation1 [shape = 'u32[72,128]{1,0:T(1,128)}', space=vmem, size = 0x9000, scoped, tag = 'internal scratch']
  #allocation2 [shape = 'f32[1,1]{1,0:T(1,128)S(1)}', space=vmem, size = 0x200, scoped, tag = 'scoped memory for tpu_custom_call.1']
  %s0 = inlined_call_operand.vmem [shape: f32[8,32], index: 0, kind: input, shape index: {}]
  %s1 = inlined_call_operand.vmem [shape: f32[32,16], index: 1, kind: input, shape index: {}]
  %s2 = inlined_call_operand.vmem [shape: f32[1,16], index: 2, kind: input, shape index: {}]
  %s3 = inlined_call_operand.vmem [shape: f32[1,16], index: 3, kind: input, shape index: {}]
  %s4 = inlined_call_operand.<no memory space> [shape: f32[1,1], index: 4, kind: input, shape index: {}]
  %s5 = inlined_call_operand.vmem [shape: f32[8,1], index: 5, kind: output, shape index: {}]
  %s6 = sld [smem:[#allocation0]]
  $region30: #{tpu_custom_call.1} parent=0
    _
  %s8 = ssub.s32 1, %s6
  %s9 = scalar_select 0, %s8, %s6
  %v10 = vstv %s4
  %11 = vst [vmem:[#allocation2] sm:$0x1] %v10
  // Predicated region
  $region2: #{tpu_custom_call.1} parent=0 // pred_check
    _
  $region3: #{tpu_custom_call.1} parent=0 // pred_check_branch
    %13 = sbr.rel (0) target = $region5
  $region4: #{tpu_custom_call.1} parent=0 // pred_region
    _
  $region5: #{tpu_custom_call.1} parent=0 // pred_fallthru
    _
  // Predicated region
  $region6: #{tpu_custom_call.1} parent=0 // pred_check
    _
  $region7: #{tpu_custom_call.1} parent=0 // pred_check_branch
    %15 = sbr.rel (0) target = $region9
  $region8: #{tpu_custom_call.1} parent=0 // pred_region
    _
  $region9: #{tpu_custom_call.1} parent=0 // pred_fallthru
    _
  // Predicated region
  $region10: #{tpu_custom_call.1} parent=0 // pred_check
    _
  $region11: #{tpu_custom_call.1} parent=0 // pred_check_branch
    %17 = sbr.rel (0) target = $region13
  $region12: #{tpu_custom_call.1} parent=0 // pred_region
    _
  $region13: #{tpu_custom_call.1} parent=0 // pred_fallthru
    _
  // Predicated region
  $region14: #{tpu_custom_call.1} parent=0 // pred_check
    _
  $region15: #{tpu_custom_call.1} parent=0 // pred_check_branch
    %19 = sbr.rel (0) target = $region17
  $region16: #{tpu_custom_call.1} parent=0 // pred_region
    _
  $region17: #{tpu_custom_call.1} parent=0 // pred_fallthru
    _
  // Predicated region
  $region18: #{tpu_custom_call.1} parent=0 // pred_check
    _
  $region19: #{tpu_custom_call.1} parent=0 // pred_check_branch
    %21 = sbr.rel (0) target = $region21
  $region20: #{tpu_custom_call.1} parent=0 // pred_region
    _
  $region21: #{tpu_custom_call.1} parent=0 // pred_fallthru
    _
  %v22 = vld [vmem:[%s0] sm:$0xff]
  %v23 = vld [vmem:[%s1] sm:$0xff]
  %v24 = vld [vmem:[%s1 + $0x8] sm:$0xff]
  %v25 = vld [vmem:[%s1 + $0x10] sm:$0xff]
  %v26 = vld [vmem:[%s1 + $0x18] sm:$0xff]
  %v27 = vld [vmem:[%s2] sm:$0x1]
  %v29 = vperm.slane %v27, 0
  %vm31 = vcmask 261120
  %v33 = vsel %vm31, %v22, 0
  %35 = vmatpush.msra.mxu0 0.0
  %36 = vmatpush.msra.mxu0 0.0
  %37 = vmatpush.msra.mxu0 0.0
  %38 = vmatpush.msra.mxu0 0.0
  %39 = vmatpush.msra.mxu0 0.0
  %40 = vmatpush.msra.mxu0 0.0
  %41 = vmatpush.msra.mxu0 0.0
  %42 = vmatpush.msra.mxu0 0.0
  %43 = vmatpush.msra.mxu0 0.0
  %44 = vmatpush.msra.mxu0 0.0
  %45 = vmatpush.msra.mxu0 0.0
  %46 = vmatpush.msra.mxu0 0.0
  %47 = vmatpush.msra.mxu0 %v26
  %48 = vmatpush.msra.mxu0 %v25
  %49 = vmatpush.msra.mxu0 %v24
  %50 = vmatpush.msra.mxu0 %v23
  %51 = vmatmul.f32.gmra.mxu0 %v33
  %v52 = vpop.f32.mrf.mxu0
  %v53 = vadd.f32 %v29, %v52
  %54 = vdwg.mxu0
  %v55 = vmax.f32 %v53, 0.0
  %v56 = vld [vmem:[%s3] sm:$0x1]
  %v58 = vperm.slane %v56, 0
  %v60 = vmul.f32 %v55, %v58
  %vm61 = vcmask 130048
  %v62 = vsel %vm61, %v60, 0.0
  %63 = vadd.xlane.f32.xlu0 %v62
  %v64 = vpop.xlane.xlu0 %63
  %v65 = vld [vmem:[#allocation2] sm:$0x1]
  %v67 = vperm.slane %v65, 0
  %v69 = vadd.f32 %v64, %v67
  %vm70 = vcmask 7168
  %71 = vst.msk [vmem:[%s5] sm:$0xff] %vm70, %v69
  // Predicated region
  $region22: #{tpu_custom_call.1} parent=0 // pred_check
    _
  $region23: #{tpu_custom_call.1} parent=0 // pred_check_branch
    %73 = sbr.rel (0) target = $region25
  $region24: #{tpu_custom_call.1} parent=0 // pred_region
    _
  $region25: #{tpu_custom_call.1} parent=0 // pred_fallthru
    _
  // Predicated region
  $region26: #{tpu_custom_call.1} parent=0 // pred_check
    _
  $region27: #{tpu_custom_call.1} parent=0 // pred_check_branch
    %75 = sbr.rel (0) target = $region29
  $region28: #{tpu_custom_call.1} parent=0 // pred_region
    _
  $region29: #{tpu_custom_call.1} parent=0 // pred_fallthru
    _

</llo_original>
